<compile_context>
chip_gen: v5e
topology: v5e:2x2
jax: 0.10.0
libtpu: 0.0.40
codegen_flags: <defaults>
</compile_context>

<pallas_src>
import jax
import jax.numpy as jnp
from jax import lax
from jax.experimental import pallas as pl
from jax.experimental.pallas import tpu as pltpu

LN_EPS = 1e-5


def _round_up(n, m):
    return -(-n // m) * m


# ---------------------------------------------------------------------------
# Kernel
# ---------------------------------------------------------------------------
def _pooler_kernel(cls_ref, gamma_ref, beta_ref, w_ref, b_ref, out_ref):
    # cls_ref:   [tb, D_in]        CLS rows (selected by the BlockSpec DMA)
    # gamma_ref: [1, D_in]         LayerNorm weight
    # beta_ref:  [1, D_in]         LayerNorm bias
    # w_ref:     [D_in, D_out_p]   Linear weight, pre-transposed (canonical layout)
    # b_ref:     [1, D_out_p]      Linear bias
    # out_ref:   [tb, D_out_p]
    x = cls_ref[...].astype(jnp.float32)
    inv_d = 1.0 / x.shape[-1]

    # Two-pass LayerNorm statistics (avoids E[x^2]-E[x]^2 cancellation).
    mean = jnp.sum(x, axis=-1, keepdims=True) * inv_d
    xc = x - mean
    var = jnp.sum(xc * xc, axis=-1, keepdims=True) * inv_d
    xhat = xc * lax.rsqrt(var + LN_EPS)
    y = xhat * gamma_ref[...].astype(jnp.float32) + beta_ref[...].astype(jnp.float32)

    w = w_ref[...]
    if w.dtype != jnp.float32:           # static: bf16 weights -> native bf16 MXU path
        y = y.astype(w.dtype)
    # Canonical [tb, D_in] @ [D_in, D_out_p] -> no in-kernel weight transpose.
    z = jnp.dot(y, w, preferred_element_type=jnp.float32)
    z = z + b_ref[...].astype(jnp.float32)

    if out_ref.dtype == jnp.bfloat16:
        # v6e/v7x: packed bf16 tanh on the EUP (~2x throughput); precision is
        # already bounded by the bf16 output.  (f32 output keeps the f32 path,
        # which is also what v5e's EUP wants.)
        out_ref[...] = jnp.tanh(z.astype(jnp.bfloat16)).astype(out_ref.dtype)
    else:
        out_ref[...] = jnp.tanh(z).astype(out_ref.dtype)


# ---------------------------------------------------------------------------
# One-time parameter preparation (hoisted out of the per-call path)
# ---------------------------------------------------------------------------
def prepare_pooler_params(ln_gamma, ln_beta, dense_w, dense_b, *, weight_dtype=None):
    """dense_w: [D_out, D_in] (PyTorch layout). Call once; reuse the result.

    weight_dtype=jnp.bfloat16 is recommended on v5e (2x MXU rate, half the
    weight DMA/VMEM); accumulation stays f32 in the kernel.
    """
    D_out, D_in = dense_w.shape
    d_out_p = _round_up(D_out, 128)          # lane-dense output stores
    w_t = dense_w.T                          # [D_in, D_out] — one-time transpose
    if d_out_p != D_out:
        w_t = jnp.pad(w_t, ((0, 0), (0, d_out_p - D_out)))
        b = jnp.pad(dense_b, ((0, d_out_p - D_out),))
    else:
        b = dense_b
    if weight_dtype is not None:
        w_t = w_t.astype(weight_dtype)
    return dict(
        gamma=ln_gamma.reshape(1, D_in),
        beta=ln_beta.reshape(1, D_in),
        w=w_t,                               # [D_in, D_out_p]
        b=b.reshape(1, d_out_p),
        d_in=D_in, d_out=D_out, d_out_p=d_out_p,
    )


# ---------------------------------------------------------------------------
# Feature detection: single-buffered grid-invariant params (VMEM-only win).
# Probed once with a tiny standalone kernel so a failure here can never affect
# the structural optimizations (folded CLS DMA, pre-transposed weight, tiling).
# ---------------------------------------------------------------------------
_PARAM_SINGLE_BUFFER = None


def _single_buffer_supported():
    global _PARAM_SINGLE_BUFFER
    if _PARAM_SINGLE_BUFFER is None:
        try:
            def _probe(p_ref, o_ref):
                o_ref[...] = p_ref[...]
            p = jnp.zeros((8, 128), jnp.float32)
            jax.block_until_ready(pl.pallas_call(
                _probe,
                out_shape=jax.ShapeDtypeStruct((8, 128), jnp.float32),
                grid=(1,),
                in_specs=[pl.BlockSpec((8, 128), lambda i: (0, 0),
                                       pipeline_mode=pl.Buffered(1))],
                out_specs=pl.BlockSpec((8, 128), lambda i: (0, 0)),
            )(p))
            _PARAM_SINGLE_BUFFER = True
        except Exception:
            _PARAM_SINGLE_BUFFER = False
    return _PARAM_SINGLE_BUFFER


# ---------------------------------------------------------------------------
# Forward
# ---------------------------------------------------------------------------
def pooler_forward(x, params, *, block_b=None):
    """x: [B, T, D_in]; params: from prepare_pooler_params() -> [B, D_out]."""
    B, T, D_in = x.shape
    assert D_in == params["d_in"], (D_in, params["d_in"])
    D_out, d_out_p = params["d_out"], params["d_out_p"]
    out_dtype = x.dtype

    # --- batch tile ---------------------------------------------------------
    if block_b is not None:
        tb = int(block_b)
    else:
        tb = min(B, 256)                      # amortize ~0.35 us per-step overhead
        if B > 8:
            # Guarantee >= 2 grid steps so the "parallel" axis can shard across
            # both TensorCores on v7x; extra cost elsewhere is one grid step.
            tb = min(tb, _round_up(pl.cdiv(B, 2), 8))
    # TODO(synk): for very large tb*D configs, re-check VMEM headroom per
    # generation (v7x has 64 MiB physical) and set vmem_limit_bytes accordingly.

    # --- CLS fetch folded into the kernel ------------------------------------
    # Reshape (free view) so token-0 features are columns [0, D_in) of each
    # [T*D_in]-wide row; the BlockSpec then DMAs exactly the CLS rows.
    fold = (D_in % 128 == 0) or (T == 1)
    if fold:
        x_in = x.reshape(B, T * D_in)
    else:
        # TODO(synk): lane-unaligned D_in — fall back to an XLA slice.
        x_in = x[:, 0, :]
    x_spec = pl.BlockSpec((tb, D_in), lambda i: (i, 0))

    single_buffer = _single_buffer_supported()

    def param_spec(shape):
        # Grid-invariant operands: block index never changes, so Pallas skips
        # re-DMA; Buffered(1) additionally halves their VMEM allocation.
        if single_buffer:
            return pl.BlockSpec(shape, lambda i: (0, 0),
                                pipeline_mode=pl.Buffered(1))
        return pl.BlockSpec(shape, lambda i: (0, 0))

    out = pl.pallas_call(
        _pooler_kernel,
        out_shape=jax.ShapeDtypeStruct((B, d_out_p), out_dtype),
        grid=(pl.cdiv(B, tb),),
        in_specs=[
            x_spec,
            param_spec((1, D_in)),
            param_spec((1, D_in)),
            param_spec((D_in, d_out_p)),
            param_spec((1, d_out_p)),
        ],
        out_specs=pl.BlockSpec((tb, d_out_p), lambda i: (i, 0)),
        compiler_params=pltpu.CompilerParams(
            dimension_semantics=("parallel",)),
    )(x_in, params["gamma"], params["beta"], params["w"], params["b"])

    return out[:, :D_out] if d_out_p != D_out else out


# ---------------------------------------------------------------------------
# Pure-JAX reference
# ---------------------------------------------------------------------------
def pooler_reference(x, ln_gamma, ln_beta, dense_w, dense_b):
    cls_rep = x[:, 0, :].astype(jnp.float32)
    mean = jnp.mean(cls_rep, axis=-1, keepdims=True)
    var = jnp.mean((cls_rep - mean) ** 2, axis=-1, keepdims=True)
    y = (cls_rep - mean) / jnp.sqrt(var + LN_EPS) * ln_gamma + ln_beta
    return jnp.tanh(y @ dense_w.T + dense_b)


if __name__ == "__main__":
    # Small, lane-aligned shapes (BEiT-3 pooler style): B=16, T=8, D=128.
    B, T, D_in, D_out = 16, 8, 128, 128

    key = jax.random.PRNGKey(0)
    kx, kg, kb, kw, kbias = jax.random.split(key, 5)

    x = jax.random.normal(kx, (B, T, D_in), dtype=jnp.float32)
    ln_gamma = 1.0 + 0.01 * jax.random.normal(kg, (D_in,), dtype=jnp.float32)
    ln_beta = 0.01 * jax.random.normal(kb, (D_in,), dtype=jnp.float32)
    dense_w = 0.05 * jax.random.normal(kw, (D_out, D_in), dtype=jnp.float32)
    dense_b = 0.02 * jax.random.normal(kbias, (D_out,), dtype=jnp.float32)

    # One-time parameter prep (transpose / pad / reshape hoisted out of the call).
    params = prepare_pooler_params(ln_gamma, ln_beta, dense_w, dense_b)

    # Default tb selection gives tb=8 -> 2-step grid: exercises pipelining and
    # the megacore-parallel axis.
    out = pooler_forward(x, params)
    out = jax.block_until_ready(out)

    ref = pooler_reference(x, ln_gamma, ln_beta, dense_w, dense_b)
    assert out.shape == (B, D_out), out.shape
    assert jnp.allclose(out, ref, atol=2e-5, rtol=2e-5), "mismatch vs reference"

    print("KERNEL_OK")
</pallas_src>

<mosaic_0001>
module attributes {stable_mosaic.version = 11 : i64} {
  func.func @_probe(%arg0: i32, %arg1: memref<8x128xf32, #tpu.memory_space<vmem>>, %arg2: memref<8x128xf32, #tpu.memory_space<vmem>>) attributes {dimension_semantics = [#tpu.dimension_semantics<arbitrary>], iteration_bounds = array<i64: 1>, scalar_prefetch = 0 : i64, scratch_operands = 0 : i64, tpu.core_type = #tpu.core_type<tc>, window_params = [{pipeline_mode = #tpu.pipeline_mode<synchronous>, transform_indices = @transform_0, window_bounds = array<i64: 8, 128>}, {pipeline_mode = #tpu.pipeline_mode<synchronous>, transform_indices = @transform_1, window_bounds = array<i64: 8, 128>}]} {
    %c0 = arith.constant 0 : index
    %c0_0 = arith.constant 0 : index
    %0 = vector.load %arg1[%c0, %c0_0] : memref<8x128xf32, #tpu.memory_space<vmem>>, vector<8x128xf32>
    %c0_1 = arith.constant 0 : index
    %c0_2 = arith.constant 0 : index
    %1 = vector.load %arg2[%c0_1, %c0_2] : memref<8x128xf32, #tpu.memory_space<vmem>>, vector<8x128xf32>
    tpu.vector_store %arg2[%c0_1, %c0_2], %0 {strides = array<i32>} : memref<8x128xf32, #tpu.memory_space<vmem>>, vector<8x128xf32>,
    return
  }
  func.func @transform_0(%arg0: i32) -> (i32, i32) {
    %c0_i32 = arith.constant 0 : i32
    %c0_i32_0 = arith.constant 0 : i32
    %c0_i32_1 = arith.constant 0 : i32
    return %c0_i32, %c0_i32_0 : i32, i32
  }
  func.func @transform_1(%arg0: i32) -> (i32, i32) {
    %c0_i32 = arith.constant 0 : i32
    %c0_i32_0 = arith.constant 0 : i32
    %c0_i32_1 = arith.constant 0 : i32
    return %c0_i32, %c0_i32_0 : i32, i32
  }
}

module attributes {stable_mosaic.version = 11 : i64} {
  func.func @_pooler_kernel(%arg0: i32, %arg1: memref<8x128xf32, #tpu.memory_space<vmem>>, %arg2: memref<1x128xf32, #tpu.memory_space<vmem>>, %arg3: memref<1x128xf32, #tpu.memory_space<vmem>>, %arg4: memref<128x128xf32, #tpu.memory_space<vmem>>, %arg5: memref<1x128xf32, #tpu.memory_space<vmem>>, %arg6: memref<8x128xf32, #tpu.memory_space<vmem>>) attributes {dimension_semantics = [#tpu.dimension_semantics<parallel>], iteration_bounds = array<i64: 2>, scalar_prefetch = 0 : i64, scratch_operands = 0 : i64, tpu.core_type = #tpu.core_type<tc>, window_params = [{transform_indices = @transform_0, window_bounds = array<i64: 8, 128>}, {pipeline_mode = #tpu.pipeline_mode<synchronous>, transform_indices = @transform_1, window_bounds = array<i64: 1, 128>}, {pipeline_mode = #tpu.pipeline_mode<synchronous>, transform_indices = @transform_2, window_bounds = array<i64: 1, 128>}, {pipeline_mode = #tpu.pipeline_mode<synchronous>, transform_indices = @transform_3, window_bounds = array<i64: 128, 128>}, {pipeline_mode = #tpu.pipeline_mode<synchronous>, transform_indices = @transform_4, window_bounds = array<i64: 1, 128>}, {transform_indices = @transform_5, window_bounds = array<i64: 8, 128>}]} {
    %c0 = arith.constant 0 : index
    %c0_0 = arith.constant 0 : index
    %0 = vector.load %arg1[%c0, %c0_0] : memref<8x128xf32, #tpu.memory_space<vmem>>, vector<8x128xf32>
    %cst = arith.constant dense<0.000000e+00> : vector<8xf32>
    %1 = vector.multi_reduction <add>, %0, %cst [1] : vector<8x128xf32> to vector<8xf32>
    %2 = vector.shape_cast %1 : vector<8xf32> to vector<8x1xf32>
    %cst_1 = arith.constant 7.812500e-03 : f32
    %3 = vector.broadcast %cst_1 : f32 to vector<8x1xf32>
    %4 = arith.mulf %2, %3 : vector<8x1xf32>
    %5 = vector.broadcast %4 : vector<8x1xf32> to vector<8x128xf32>
    %6 = arith.subf %0, %5 : vector<8x128xf32>
    %7 = arith.mulf %6, %6 : vector<8x128xf32>
    %cst_2 = arith.constant dense<0.000000e+00> : vector<8xf32>
    %8 = vector.multi_reduction <add>, %7, %cst_2 [1] : vector<8x128xf32> to vector<8xf32>
    %9 = vector.shape_cast %8 : vector<8xf32> to vector<8x1xf32>
    %cst_3 = arith.constant 7.812500e-03 : f32
    %10 = vector.broadcast %cst_3 : f32 to vector<8x1xf32>
    %11 = arith.mulf %9, %10 : vector<8x1xf32>
    %cst_4 = arith.constant 9.99999974E-6 : f32
    %12 = vector.broadcast %cst_4 : f32 to vector<8x1xf32>
    %13 = arith.addf %11, %12 : vector<8x1xf32>
    %14 = math.rsqrt %13 : vector<8x1xf32>
    %15 = vector.broadcast %14 : vector<8x1xf32> to vector<8x128xf32>
    %16 = arith.mulf %6, %15 : vector<8x128xf32>
    %c0_5 = arith.constant 0 : index
    %c0_6 = arith.constant 0 : index
    %17 = vector.load %arg2[%c0_5, %c0_6] : memref<1x128xf32, #tpu.memory_space<vmem>>, vector<1x128xf32>
    %18 = vector.broadcast %17 : vector<1x128xf32> to vector<8x128xf32>
    %19 = arith.mulf %16, %18 : vector<8x128xf32>
    %c0_7 = arith.constant 0 : index
    %c0_8 = arith.constant 0 : index
    %20 = vector.load %arg3[%c0_7, %c0_8] : memref<1x128xf32, #tpu.memory_space<vmem>>, vector<1x128xf32>
    %21 = vector.broadcast %20 : vector<1x128xf32> to vector<8x128xf32>
    %22 = arith.addf %19, %21 : vector<8x128xf32>
    %c0_9 = arith.constant 0 : index
    %c0_10 = arith.constant 0 : index
    %23 = vector.load %arg4[%c0_9, %c0_10] : memref<128x128xf32, #tpu.memory_space<vmem>>, vector<128x128xf32>
    %cst_11 = arith.constant dense<0.000000e+00> : vector<8x128xf32>
    %24 = tpu.matmul %22, %23, %cst_11 {dimension_numbers = #tpu.dot_dimension_numbers<[1], [0], [0], [1], [0, 0, 1, 1], [], []>} : vector<8x128xf32>, vector<128x128xf32>, vector<8x128xf32> -> vector<8x128xf32>
    %c0_12 = arith.constant 0 : index
    %c0_13 = arith.constant 0 : index
    %25 = vector.load %arg5[%c0_12, %c0_13] : memref<1x128xf32, #tpu.memory_space<vmem>>, vector<1x128xf32>
    %26 = vector.broadcast %25 : vector<1x128xf32> to vector<8x128xf32>
    %27 = arith.addf %24, %26 : vector<8x128xf32>
    %28 = math.tanh %27 : vector<8x128xf32>
    %c0_14 = arith.constant 0 : index
    %c0_15 = arith.constant 0 : index
    %29 = vector.load %arg6[%c0_14, %c0_15] : memref<8x128xf32, #tpu.memory_space<vmem>>, vector<8x128xf32>
    tpu.vector_store %arg6[%c0_14, %c0_15], %28 {strides = array<i32>} : memref<8x128xf32, #tpu.memory_space<vmem>>, vector<8x128xf32>,
    return
  }
  func.func @transform_0(%arg0: i32) -> (i32, i32) {
    %c0_i32 = arith.constant 0 : i32
    %c0_i32_0 = arith.constant 0 : i32
    return %arg0, %c0_i32 : i32, i32
  }
  func.func @transform_1(%arg0: i32) -> (i32, i32) {
    %c0_i32 = arith.constant 0 : i32
    %c0_i32_0 = arith.constant 0 : i32
    %c0_i32_1 = arith.constant 0 : i32
    return %c0_i32, %c0_i32_0 : i32, i32
  }
  func.func @transform_2(%arg0: i32) -> (i32, i32) {
    %c0_i32 = arith.constant 0 : i32
    %c0_i32_0 = arith.constant 0 : i32
    %c0_i32_1 = arith.constant 0 : i32
    return %c0_i32, %c0_i32_0 : i32, i32
  }
  func.func @transform_3(%arg0: i32) -> (i32, i32) {
    %c0_i32 = arith.constant 0 : i32
    %c0_i32_0 = arith.constant 0 : i32
    %c0_i32_1 = arith.constant 0 : i32
    return %c0_i32, %c0_i32_0 : i32, i32
  }
  func.func @transform_4(%arg0: i32) -> (i32, i32) {
    %c0_i32 = arith.constant 0 : i32
    %c0_i32_0 = arith.constant 0 : i32
    %c0_i32_1 = arith.constant 0 : i32
    return %c0_i32, %c0_i32_0 : i32, i32
  }
  func.func @transform_5(%arg0: i32) -> (i32, i32) {
    %c0_i32 = arith.constant 0 : i32
    %c0_i32_0 = arith.constant 0 : i32
    return %arg0, %c0_i32 : i32, i32
  }
}

</mosaic_0001>

<llo_original>
// kernel: tpu_custom_call.1
$region0: #{tpu_custom_call.1}
  #allocation0 [shape = 'u32[]', space=smem, size = 0x4, offset = 0x4, fixed_abs, tag = 'smem constant byte address 0x4 - core index']
  #allocation1 [shape = 'u32[72,128]{1,0:T(1,128)}', space=vmem, size = 0x9000, scoped, tag = 'internal scratch']
  %s0 = inlined_call_operand.hbm [shape: f32[8,128], index: 0, kind: input, shape index: {}]
  %s1 = inlined_call_operand.hbm [shape: f32[8,128], index: 1, kind: output, shape index: {}]
  %s2 = sld [smem:[#allocation0]]
  $region18: #{tpu_custom_call.1} parent=0
    _
  %s4 = ssub.s32 1, %s2
  %s5 = scalar_select 0, %s4, %s2
  $region1: #{tpu_custom_call.1} parent=0
    #allocation2 [shape = 'u8[4096]{0}', space=vmem, size = 0x1000, scoped, tag = 'input window, operand 0, single buffered']
    #allocation3 [shape = 's32[1]{0}', space=sflag, size = 0x4, scoped, tag = 'scoped memory for tpu_custom_call.1']
    #allocation4 [shape = 's32[1]{0}', space=sflag, size = 0x4, scoped, tag = 'scoped memory for tpu_custom_call.1']
    #allocation5 [shape = 'u8[4096]{0}', space=vmem, size = 0x1000, scoped, tag = 'output window, operand 0, single buffered']
    %6 = vsyncpa [#allocation3], 0
    %7 = vsyncpa [#allocation4], 0
    // Predicated region
    $region2: #{tpu_custom_call.1} parent=1 // pred_check
      _
    $region3: #{tpu_custom_call.1} parent=1 // pred_check_branch
      %9 = sbr.rel (0) target = $region5
    $region4: #{tpu_custom_call.1} parent=1 // pred_region
      %11 = vsyncadd [#allocation3], 0
      %s13 = sshll.u32 %s0, 4
      %s14 = int_to_ptr.hbm [resolvable:$true] %s13
      %s15 = sshll.u32 [#allocation2], 4
      %s16 = int_to_ptr.vmem [resolvable:$true] %s15
      %18 = dma.hbm_to_vmem [thread:$0]  %s14, 128, %s16, [#allocation3]
    $region5: #{tpu_custom_call.1} parent=1 // pred_fallthru
      _
    // Predicated region
    $region6: #{tpu_custom_call.1} parent=1 // pred_check
      _
    $region7: #{tpu_custom_call.1} parent=1 // pred_check_branch
      %20 = sbr.rel (0) target = $region9
    $region8: #{tpu_custom_call.1} parent=1 // pred_region
      %22 = dma.done [#allocation3], 128
    $region9: #{tpu_custom_call.1} parent=1 // pred_fallthru
      _
    %v23 = vld [vmem:[#allocation2] sm:$0xff]
    %24 = vst [vmem:[#allocation5] sm:$0xff] %v23
    // Predicated region
    $region10: #{tpu_custom_call.1} parent=1 // pred_check
      _
    $region11: #{tpu_custom_call.1} parent=1 // pred_check_branch
      %26 = sbr.rel (0) target = $region13
    $region12: #{tpu_custom_call.1} parent=1 // pred_region
      %28 = vsyncadd [#allocation4], 0
      %s30 = sshll.u32 [#allocation5], 4
      %s31 = int_to_ptr.vmem [resolvable:$true] %s30
      %s32 = sshll.u32 %s1, 4
      %s33 = int_to_ptr.hbm [resolvable:$true] %s32
      %35 = dma.vmem_to_hbm [thread:$0]  %s31, 128, %s33, [#allocation4]
    $region13: #{tpu_custom_call.1} parent=1 // pred_fallthru
      _
    // Predicated region
    $region14: #{tpu_custom_call.1} parent=1 // pred_check
      _
    $region15: #{tpu_custom_call.1} parent=1 // pred_check_branch
      %37 = sbr.rel (0) target = $region17
    $region16: #{tpu_custom_call.1} parent=1 // pred_region
      %39 = dma.done [#allocation4], 128
    $region17: #{tpu_custom_call.1} parent=1 // pred_fallthru
      _
    %40 = vsyncpa [#allocation3], 1
    %41 = vsyncpa [#allocation4], 1

// kernel: tpu_custom_call.1
$region0: #{tpu_custom_call.1}
  #allocation0 [shape = 'u32[]', space=smem, size = 0x4, offset = 0x4, fixed_abs, tag = 'smem constant byte address 0x4 - core index']
  #allocation1 [shape = 'u32[72,128]{1,0:T(1,128)}', space=vmem, size = 0x9000, scoped, tag = 'internal scratch']
  %s0 = inlined_call_operand.hbm [shape: f32[16,1024], index: 0, kind: input, shape index: {}]
  %s1 = inlined_call_operand.hbm [shape: f32[1,128], index: 1, kind: input, shape index: {}]
  %s2 = inlined_call_operand.vmem [shape: f32[1,128], index: 2, kind: input, shape index: {}]
  %s3 = inlined_call_operand.hbm [shape: f32[128,128], index: 3, kind: input, shape index: {}]
  %s4 = inlined_call_operand.vmem [shape: f32[1,128], index: 4, kind: input, shape index: {}]
  %s5 = inlined_call_operand.hbm [shape: f32[16,128], index: 5, kind: output, shape index: {}]
  %s6 = sld [smem:[#allocation0]]
  $region65: #{tpu_custom_call.1} parent=0
    _
  %s8 = ssub.s32 1, %s6
  %s9 = scalar_select 0, %s8, %s6
  $region1: #{tpu_custom_call.1} parent=0
    #allocation2 [shape = 'u8[8192]{0}', space=vmem, size = 0x2000, scoped, tag = 'input window, operand 0']
    #allocation3 [shape = 's32[2]{0}', space=sflag, size = 0x8, scoped, tag = 'scoped memory for tpu_custom_call.1']
    #allocation4 [shape = 's32[2]{0}', space=sflag, size = 0x8, scoped, tag = 'scoped memory for tpu_custom_call.1']
    #allocation5 [shape = 'u8[512]{0}', space=vmem, size = 0x400, scoped, tag = 'input window, operand 1, single buffered']
    #allocation6 [shape = 's32[1]{0}', space=sflag, size = 0x4, scoped, tag = 'scoped memory for tpu_custom_call.1']
    #allocation7 [shape = 'u8[65536]{0}', space=vmem, size = 0x10000, scoped, tag = 'input window, operand 3, single buffered']
    #allocation8 [shape = 'u8[8192]{0}', space=vmem, size = 0x2000, scoped, tag = 'output window, operand 0']
    %10 = vsyncpa [#allocation3], 0
    %s11 = scalar_lea.sflag [#allocation3], 1
    %12 = vsyncpa %s11, 0
    %13 = vsyncpa [#allocation6], 0
    %14 = vsyncpa [#allocation4], 0
    %s15 = scalar_lea.sflag [#allocation4], 1
    %16 = vsyncpa %s15, 0
    loop: start=0, step=1, limit=4
    $region2: #{tpu_custom_call.1} parent=1 // loop_pre_header
      _
    $region3: #{tpu_custom_call.1} parent=1 // loop_header
      %s18 = sphi 0, %s22
      %p19 = scmp.ge.s32.totalorder %s18, 4
      %s28 = sphi 0, %s30
      %s31 = sphi 0, %s28
      %s32 = sphi 0, %s31
      %s48 = sphi 0, %s32
      %s52 = sphi 0, %s52
      %s54 = sphi 0, %s52
      %s55 = sphi 0, %s54
      %s69 = sphi 0, %s55
      %s73 = sphi 0, %s73
      %s75 = sphi 0, %s73
      %s76 = sphi 0, %s75
      %s90 = sphi 0, %s76
      %s94 = sphi 0, %s94
      %s96 = sphi 0, %s94
      %s97 = sphi 0, %s96
      %s111 = sphi 0, %s97
      %s115 = sphi 0, %s115
      %s117 = sphi 0, %s115
      %s118 = sphi 0, %s117
      %s132 = sphi 0, %s118
      %s138 = sphi 0, %s140
      %s141 = sphi 0, %s138
      %s142 = sphi 0, %s141
      %s158 = sphi 0, %s142
    $region4: #{tpu_custom_call.1} parent=1 // loop_header_branch
      %21 = sbr.rel (%p19) target = $region8
    $region5: #{tpu_custom_call.1} parent=1 // loop_body
      %s23 = ssub.s32 %s18, 1
      %s24 = ssub.s32 %s18, 2
      %s25 = sadd.s32 %s18, 1
      %s26 = ssub.s32 %s18, %s25
      %p27 = scmp.eq.s32.totalorder %s26, 0
      %s29 = sadd.s32 %s28, 1
      %s30 = scalar_select %p27, %s28, %s29
      %p33 = pneg %p27
      %p34 = scmp.eq.s32.totalorder %s18, 1
      %p35 = por %p33, %p34
      %p36 = scmp.ne.s32.totalorder %s28, %s31
      %p37 = scmp.eq.s32.totalorder %s18, 0
      %p38 = por %p36, %p37
      %p39 = scmp.ne.s32.totalorder %s28, %s31
      %p40 = scmp.eq.s32.totalorder %s23, 1
      %p41 = por %p39, %p40
      %p42 = scmp.ne.s32.totalorder %s31, %s32
      %p43 = scmp.eq.s32.totalorder %s23, 0
      %p44 = por %p42, %p43
      %p45 = scmp.ne.s32.totalorder %s31, %s32
      %p46 = scmp.eq.s32.totalorder %s24, 1
      %p47 = por %p45, %p46
      %p49 = scmp.ne.s32.totalorder %s32, %s48
      %p50 = scmp.eq.s32.totalorder %s24, 0
      %p51 = por %p49, %p50
      %s53 = sadd.s32 %s52, 1
      %p56 = scmp.eq.s32.totalorder %s18, 1
      %p57 = scmp.ne.s32.totalorder %s52, %s54
      %p58 = scmp.eq.s32.totalorder %s18, 0
      %p59 = por %p57, %p58
      %p60 = scmp.ne.s32.totalorder %s52, %s54
      %p61 = scmp.eq.s32.totalorder %s23, 1
      %p62 = por %p60, %p61
      %p63 = scmp.ne.s32.totalorder %s54, %s55
      %p64 = scmp.eq.s32.totalorder %s23, 0
      %p65 = por %p63, %p64
      %p66 = scmp.ne.s32.totalorder %s54, %s55
      %p67 = scmp.eq.s32.totalorder %s24, 1
      %p68 = por %p66, %p67
      %p70 = scmp.ne.s32.totalorder %s55, %s69
      %p71 = scmp.eq.s32.totalorder %s24, 0
      %p72 = por %p70, %p71
      %s74 = sadd.s32 %s73, 1
      %p77 = scmp.eq.s32.totalorder %s18, 1
      %p78 = scmp.ne.s32.totalorder %s73, %s75
      %p79 = scmp.eq.s32.totalorder %s18, 0
      %p80 = por %p78, %p79
      %p81 = scmp.ne.s32.totalorder %s73, %s75
      %p82 = scmp.eq.s32.totalorder %s23, 1
      %p83 = por %p81, %p82
      %p84 = scmp.ne.s32.totalorder %s75, %s76
      %p85 = scmp.eq.s32.totalorder %s23, 0
      %p86 = por %p84, %p85
      %p87 = scmp.ne.s32.totalorder %s75, %s76
      %p88 = scmp.eq.s32.totalorder %s24, 1
      %p89 = por %p87, %p88
      %p91 = scmp.ne.s32.totalorder %s76, %s90
      %p92 = scmp.eq.s32.totalorder %s24, 0
      %p93 = por %p91, %p92
      %s95 = sadd.s32 %s94, 1
      %p98 = scmp.eq.s32.totalorder %s18, 1
      %p99 = scmp.ne.s32.totalorder %s94, %s96
      %p100 = scmp.eq.s32.totalorder %s18, 0
      %p101 = por %p99, %p100
      %p102 = scmp.ne.s32.totalorder %s94, %s96
      %p103 = scmp.eq.s32.totalorder %s23, 1
      %p104 = por %p102, %p103
      %p105 = scmp.ne.s32.totalorder %s96, %s97
      %p106 = scmp.eq.s32.totalorder %s23, 0
      %p107 = por %p105, %p106
      %p108 = scmp.ne.s32.totalorder %s96, %s97
      %p109 = scmp.eq.s32.totalorder %s24, 1
      %p110 = por %p108, %p109
      %p112 = scmp.ne.s32.totalorder %s97, %s111
      %p113 = scmp.eq.s32.totalorder %s24, 0
      %p114 = por %p112, %p113
      %s116 = sadd.s32 %s115, 1
      %p119 = scmp.eq.s32.totalorder %s18, 1
      %p120 = scmp.ne.s32.totalorder %s115, %s117
      %p121 = scmp.eq.s32.totalorder %s18, 0
      %p122 = por %p120, %p121
      %p123 = scmp.ne.s32.totalorder %s115, %s117
      %p124 = scmp.eq.s32.totalorder %s23, 1
      %p125 = por %p123, %p124
      %p126 = scmp.ne.s32.totalorder %s117, %s118
      %p127 = scmp.eq.s32.totalorder %s23, 0
      %p128 = por %p126, %p127
      %p129 = scmp.ne.s32.totalorder %s117, %s118
      %p130 = scmp.eq.s32.totalorder %s24, 1
      %p131 = por %p129, %p130
      %p133 = scmp.ne.s32.totalorder %s118, %s132
      %p134 = scmp.eq.s32.totalorder %s24, 0
      %p135 = por %p133, %p134
      %s136 = ssub.s32 %s18, %s25
      %p137 = scmp.eq.s32.totalorder %s136, 0
      %s139 = sadd.s32 %s138, 1
      %s140 = scalar_select %p137, %s138, %s139
      %p143 = pneg %p137
      %p144 = scmp.eq.s32.totalorder %s18, 1
      %p145 = por %p143, %p144
      %p146 = scmp.ne.s32.totalorder %s138, %s141
      %p147 = scmp.eq.s32.totalorder %s18, 0
      %p148 = por %p146, %p147
      %p149 = scmp.ne.s32.totalorder %s138, %s141
      %p150 = scmp.eq.s32.totalorder %s23, 1
      %p151 = por %p149, %p150
      %p152 = scmp.ne.s32.totalorder %s141, %s142
      %p153 = scmp.eq.s32.totalorder %s23, 0
      %p154 = por %p152, %p153
      %p155 = scmp.ne.s32.totalorder %s141, %s142
      %p156 = scmp.eq.s32.totalorder %s24, 1
      %p157 = por %p155, %p156
      %p159 = scmp.ne.s32.totalorder %s142, %s158
      %p160 = scmp.eq.s32.totalorder %s24, 0
      %p161 = por %p159, %p160
      %p162 = scmp.le.s32.totalorder 1, %s18
      %p163 = scmp.lt.s32.totalorder %s18, 3
      %p164 = pnand %p162, %p163
      %p165 = pneg %p164
      // Predicated region
      $region9: #{tpu_custom_call.1} parent=5 // pred_check
        _
      $region10: #{tpu_custom_call.1} parent=5 // pred_check_branch
        %167 = sbr.rel (%p164) target = $region12
      $region11: #{tpu_custom_call.1} parent=5 // pred_region
        %s168 = ssub.s32 %s18, 1
        // Predicated region
        $region13: #{tpu_custom_call.1} parent=11 // pred_check
          %p169 = pneg %p65
        $region14: #{tpu_custom_call.1} parent=11 // pred_check_branch
          %171 = sbr.rel (%p169) target = $region16
        $region15: #{tpu_custom_call.1} parent=11 // pred_region
          %173 = vsyncadd [#allocation6], 0
          %s175 = sshll.u32 %s1, 4
          %s176 = int_to_ptr.hbm [resolvable:$true] %s175
          %s177 = sshll.u32 [#allocation5], 4
          %s178 = int_to_ptr.vmem [resolvable:$true] %s177
          %180 = dma.hbm_to_vmem [thread:$0]  %s176, 16, %s178, [#allocation6]
        $region16: #{tpu_custom_call.1} parent=11 // pred_fallthru
          _
        // Predicated region
        $region17: #{tpu_custom_call.1} parent=11 // pred_check
          %p181 = pneg %p86
        $region18: #{tpu_custom_call.1} parent=11 // pred_check_branch
          %183 = sbr.rel (%p181) target = $region20
        $region19: #{tpu_custom_call.1} parent=11 // pred_region
          _
        $region20: #{tpu_custom_call.1} parent=11 // pred_fallthru
          _
        // Predicated region
        $region21: #{tpu_custom_call.1} parent=11 // pred_check
          %p184 = pneg %p107
        $region22: #{tpu_custom_call.1} parent=11 // pred_check_branch
          %186 = sbr.rel (%p184) target = $region24
        $region23: #{tpu_custom_call.1} parent=11 // pred_region
          %188 = vsyncadd [#allocation6], 0
          %s189 = sshll.u32 %s3, 4
          %s190 = int_to_ptr.hbm [resolvable:$true] %s189
          %s191 = sshll.u32 [#allocation7], 4
          %s192 = int_to_ptr.vmem [resolvable:$true] %s191
          %197 = dma.hbm_to_vmem [thread:$0]  %s190, 2048, %s192, [#allocation6], 128, 128, 8
        $region24: #{tpu_custom_call.1} parent=11 // pred_fallthru
          _
        // Predicated region
        $region25: #{tpu_custom_call.1} parent=11 // pred_check
          %p198 = pneg %p128
        $region26: #{tpu_custom_call.1} parent=11 // pred_check_branch
          %200 = sbr.rel (%p198) target = $region28
        $region27: #{tpu_custom_call.1} parent=11 // pred_region
          _
        $region28: #{tpu_custom_call.1} parent=11 // pred_fallthru
          _
      $region12: #{tpu_custom_call.1} parent=5 // pred_fallthru
        _
      %p201 = scmp.lt.s32.totalorder %s18, 2
      // Predicated region
      $region29: #{tpu_custom_call.1} parent=5 // pred_check
        %p202 = pneg %p201
      $region30: #{tpu_custom_call.1} parent=5 // pred_check_branch
        %204 = sbr.rel (%p202) target = $region32
      $region31: #{tpu_custom_call.1} parent=5 // pred_region
        // Predicated region
        $region33: #{tpu_custom_call.1} parent=31 // pred_check
          %p205 = pneg %p38
        $region34: #{tpu_custom_call.1} parent=31 // pred_check_branch
          %207 = sbr.rel (%p205) target = $region36
        $region35: #{tpu_custom_call.1} parent=31 // pred_region
          %s208 = sand.u32 %s28, 1
          %s209 = scalar_lea.sflag [#allocation3], %s208
          %s210 = sand.u32 %s28, 1
          %s211 = smul.addr %s210, 8
          %s212 = scalar_lea.vmem [#allocation2], %s211
          %214 = vsyncadd %s209, 0
          %s215 = smul.addr %s18, 8
          %s216 = smul.addr %s215, 8
          %s217 = scalar_lea.hbm %s0, %s216
          %s219 = sshll.u32 %s217, 4
          %s220 = int_to_ptr.hbm [resolvable:$true] %s219
          %s221 = sshll.u32 %s212, 4
          %s222 = int_to_ptr.vmem [resolvable:$true] %s221
          %224 = dma.hbm_to_vmem [thread:$0]  %s220, 128, %s222, %s209
        $region36: #{tpu_custom_call.1} parent=31 // pred_fallthru
          _
      $region32: #{tpu_custom_call.1} parent=5 // pred_fallthru
        _
      %p225 = scmp.le.s32.totalorder 1, %s18
      %p226 = scmp.lt.s32.totalorder %s18, 3
      %p227 = pnand %p225, %p226
      %p228 = pneg %p227
      // Predicated region
      $region37: #{tpu_custom_call.1} parent=5 // pred_check
        _
      $region38: #{tpu_custom_call.1} parent=5 // pred_check_branch
        %230 = sbr.rel (%p227) target = $region40
      $region39: #{tpu_custom_call.1} parent=5 // pred_region
        %s231 = ssub.s32 %s18, 1
        %s232 = sand.u32 %s31, 1
        %s233 = scalar_lea.sflag [#allocation3], %s232
        %s234 = sand.u32 %s31, 1
        %s235 = smul.addr %s234, 8
        %s236 = scalar_lea.vmem [#allocation2], %s235
        // Predicated region
        $region41: #{tpu_custom_call.1} parent=39 // pred_check
          %p237 = pneg %p44
        $region42: #{tpu_custom_call.1} parent=39 // pred_check_branch
          %239 = sbr.rel (%p237) target = $region44
        $region43: #{tpu_custom_call.1} parent=39 // pred_region
          %241 = dma.done %s233, 128
        $region44: #{tpu_custom_call.1} parent=39 // pred_fallthru
          _
        // Predicated region
        $region45: #{tpu_custom_call.1} parent=39 // pred_check
          %p242 = pneg %p65
        $region46: #{tpu_custom_call.1} parent=39 // pred_check_branch
          %244 = sbr.rel (%p242) target = $region48
        $region47: #{tpu_custom_call.1} parent=39 // pred_region
          %246 = dma.done [#allocation6], 16
        $region48: #{tpu_custom_call.1} parent=39 // pred_fallthru
          _
        // Predicated region
        $region49: #{tpu_custom_call.1} parent=39 // pred_check
          %p247 = pneg %p107
        $region50: #{tpu_custom_call.1} parent=39 // pred_check_branch
          %249 = sbr.rel (%p247) target = $region52
        $region51: #{tpu_custom_call.1} parent=39 // pred_region
          %251 = dma.done [#allocation6], 2048
        $region52: #{tpu_custom_call.1} parent=39 // pred_fallthru
          _
        %s252 = sand.u32 %s31, 1
        %s253 = scalar_lea.sflag [#allocation3], %s252
        %s254 = sand.u32 %s31, 1
        %s255 = smul.addr %s254, 8
        %s256 = scalar_lea.vmem [#allocation2], %s255
        %p257 = pneg %p44
        %p258 = pneg %p41
        %p259 = pneg %p65
        %p260 = pneg %p62
        %p261 = pneg %p86
        %p262 = pneg %p83
        %p263 = pneg %p107
        %p264 = pneg %p104
        %p265 = pneg %p128
        %p266 = pneg %p125
        %p267 = pneg %p154
        %p268 = pneg %p151
        %s269 = sand.u32 %s141, 1
        %s270 = scalar_lea.sflag [#allocation4], %s269
        %s271 = sand.u32 %s141, 1
        %s272 = smul.addr %s271, 8
        %s273 = scalar_lea.vmem [#allocation8], %s272
        %v274 = vld [vmem:[%s236] sm:$0xff]
        %275 = vadd.xlane.f32.xlu0 %v274
        %v276 = vpop.xlane.xlu0 %275
        %v277 = vmul.f32 %v276, 0.0078125
        %v278 = vsub.f32 %v274, %v277
        %v279 = vmul.f32 %v278, %v278
        %280 = vadd.xlane.f32.xlu0 %v279
        %v281 = vpop.xlane.xlu0 %280
        %v282 = vmul.f32 %v281, 0.0078125
        %v283 = vadd.f32 %v282, 1e-05
        %v284 = vrsqrt.pop %v283
        %v285 = vmul.f32 %v284, %v283
        %v286 = vmul.f32 %v285, %v284
        %v287 = vmul.f32 0.5, %v286
        %v288 = vsub.f32 1.5, %v287
        %v289 = vmul.f32 %v284, %v288
        %vm290 = vweird.f32 %v283
        %vm291 = vweird.f32 %v284
        %vm292 = vmor %vm290, %vm291
        %v293 = vsel %vm292, %v284, %v289
        %v294 = vmul.f32 %v278, %v293
        %v295 = vld [vmem:[#allocation5] sm:$0x1]
        %v297 = vperm.slane %v295, 0
        %v299 = vmul.f32 %v294, %v297
        %v300 = vld [vmem:[%s2] sm:$0x1]
        %v302 = vperm.slane %v300, 0
        %v304 = vadd.f32 %v299, %v302
        %v305 = vld [vmem:[#allocation7] sm:$0xff]
        %v306 = vld [vmem:[#allocation7 + $0x8] sm:$0xff]
        %v307 = vld [vmem:[#allocation7 + $0x10] sm:$0xff]
        %v308 = vld [vmem:[#allocation7 + $0x18] sm:$0xff]
        %v309 = vld [vmem:[#allocation7 + $0x20] sm:$0xff]
        %v310 = vld [vmem:[#allocation7 + $0x28] sm:$0xff]
        %v311 = vld [vmem:[#allocation7 + $0x30] sm:$0xff]
        %v312 = vld [vmem:[#allocation7 + $0x38] sm:$0xff]
        %v313 = vld [vmem:[#allocation7 + $0x40] sm:$0xff]
        %v314 = vld [vmem:[#allocation7 + $0x48] sm:$0xff]
        %v315 = vld [vmem:[#allocation7 + $0x50] sm:$0xff]
        %v316 = vld [vmem:[#allocation7 + $0x58] sm:$0xff]
        %v317 = vld [vmem:[#allocation7 + $0x60] sm:$0xff]
        %v318 = vld [vmem:[#allocation7 + $0x68] sm:$0xff]
        %v319 = vld [vmem:[#allocation7 + $0x70] sm:$0xff]
        %v320 = vld [vmem:[#allocation7 + $0x78] sm:$0xff]
        %v321 = vld [vmem:[%s4] sm:$0x1]
        %v323 = vperm.slane %v321, 0
        %325 = vmatpush.msra.mxu0 %v320
        %326 = vmatpush.msra.mxu0 %v319
        %327 = vmatpush.msra.mxu0 %v318
        %328 = vmatpush.msra.mxu0 %v317
        %329 = vmatpush.msra.mxu0 %v316
        %330 = vmatpush.msra.mxu0 %v315
        %331 = vmatpush.msra.mxu0 %v314
        %332 = vmatpush.msra.mxu0 %v313
        %333 = vmatpush.msra.mxu0 %v312
        %334 = vmatpush.msra.mxu0 %v311
        %335 = vmatpush.msra.mxu0 %v310
        %336 = vmatpush.msra.mxu0 %v309
        %337 = vmatpush.msra.mxu0 %v308
        %338 = vmatpush.msra.mxu0 %v307
        %339 = vmatpush.msra.mxu0 %v306
        %340 = vmatpush.msra.mxu0 %v305
        %341 = vmatmul.f32.gmra.mxu0 %v304
        %v342 = vpop.f32.mrf.mxu0
        %v343 = vadd.f32 %v323, %v342
        %344 = vdwg.mxu0
        %v345 = vtanh.pop %v343
        %346 = vst [vmem:[%s273] sm:$0xff] %v345
        %s347 = sand.u32 %s141, 1
        %s348 = scalar_lea.sflag [#allocation4], %s347
        %s349 = sand.u32 %s141, 1
        %s350 = smul.addr %s349, 8
        %s351 = scalar_lea.vmem [#allocation8], %s350
        // Predicated region
        $region53: #{tpu_custom_call.1} parent=39 // pred_check
          %p352 = pneg %p151
        $region54: #{tpu_custom_call.1} parent=39 // pred_check_branch
          %354 = sbr.rel (%p352) target = $region56
        $region55: #{tpu_custom_call.1} parent=39 // pred_region
          %356 = vsyncadd %s348, 0
          %s357 = smul.addr %s23, 8
          %s358 = scalar_lea.hbm %s5, %s357
          %s360 = sshll.u32 %s351, 4
          %s361 = int_to_ptr.vmem [resolvable:$true] %s360
          %s362 = sshll.u32 %s358, 4
          %s363 = int_to_ptr.hbm [resolvable:$true] %s362
          %365 = dma.vmem_to_hbm [thread:$0]  %s361, 128, %s363, %s348
        $region56: #{tpu_custom_call.1} parent=39 // pred_fallthru
          _
      $region40: #{tpu_custom_call.1} parent=5 // pred_fallthru
        _
      %p366 = scmp.le.s32.totalorder 2, %s18
      // Predicated region
      $region57: #{tpu_custom_call.1} parent=5 // pred_check
        %p367 = pneg %p366
      $region58: #{tpu_custom_call.1} parent=5 // pred_check_branch
        %369 = sbr.rel (%p367) target = $region60
      $region59: #{tpu_custom_call.1} parent=5 // pred_region
        %s370 = ssub.s32 %s18, 2
        // Predicated region
        $region61: #{tpu_custom_call.1} parent=59 // pred_check
          %p371 = pneg %p157
        $region62: #{tpu_custom_call.1} parent=59 // pred_check_branch
          %373 = sbr.rel (%p371) target = $region64
        $region63: #{tpu_custom_call.1} parent=59 // pred_region
          %s374 = sand.u32 %s142, 1
          %s375 = scalar_lea.sflag [#allocation4], %s374
          %s376 = sand.u32 %s142, 1
          %s377 = smul.addr %s376, 8
          %s378 = scalar_lea.vmem [#allocation8], %s377
          %380 = dma.done %s375, 128
        $region64: #{tpu_custom_call.1} parent=59 // pred_fallthru
          _
      $region60: #{tpu_custom_call.1} parent=5 // pred_fallthru
        _
    $region6: #{tpu_custom_call.1} parent=1 // loop_footer
      %s22 = sadd.s32 1, %s18
    $region7: #{tpu_custom_call.1} parent=1 // loop_footer_branch
      %17 = sbr.rel target = $region3
    $region8: #{tpu_custom_call.1} parent=1 // loop_exit
      _
    %381 = vsyncpa [#allocation3], 1
    %s382 = scalar_lea.sflag [#allocation3], 1
    %383 = vsyncpa %s382, 1
    %384 = vsyncpa [#allocation6], 1
    %385 = vsyncpa [#allocation4], 1
    %s386 = scalar_lea.sflag [#allocation4], 1
    %387 = vsyncpa %s386, 1

</llo_original>
